<compile_context>
chip_gen: v5e
topology: v5e:2x2
jax: 0.10.0
libtpu: 0.0.40
codegen_flags: <defaults>
</compile_context>

<pallas_src>
import functools

import jax
import jax.numpy as jnp
from jax.experimental import pallas as pl
from jax.experimental.pallas import tpu as pltpu


def _round_up(x: int, m: int) -> int:
    return ((x + m - 1) // m) * m


# --------------------------------------------------------------------------
# Kernels
# --------------------------------------------------------------------------
def _single_block_kernel(phi_ref, w_ref, o_ref):
    """Whole problem in one VMEM block: fused matmul + ReLU, no grid."""
    o_ref[...] = jnp.maximum(
        jnp.dot(phi_ref[...], w_ref[...], preferred_element_type=jnp.float32),
        0.0,
    ).astype(o_ref.dtype)


def _tiled_kernel(phi_ref, w_ref, o_ref, acc_ref):
    """(M, K) grid: M parallel, K reduction with f32 accumulator + fused ReLU."""
    k = pl.program_id(1)

    @pl.when(k == 0)
    def _():
        acc_ref[...] = jnp.zeros_like(acc_ref)

    acc_ref[...] += jnp.dot(
        phi_ref[...], w_ref[...], preferred_element_type=jnp.float32
    )

    @pl.when(k == pl.num_programs(1) - 1)
    def _():
        o_ref[...] = jnp.maximum(acc_ref[...], 0.0).astype(o_ref.dtype)


# --------------------------------------------------------------------------
# Wrapper
# --------------------------------------------------------------------------
@functools.partial(
    jax.jit,
    static_argnames=("compute_dtype", "tm", "tk", "single_shot_limit_bytes"),
)
def initializer_no_class(
    phi_o: jax.Array,
    w_t: jax.Array,
    *,
    compute_dtype=None,          # e.g. jnp.bfloat16 to halve DMA / double MXU rate
    tm: int = 256,               # M tile (tiled path only)
    tk: int = 1024,              # K tile (tiled path only); keep >= 512
    single_shot_limit_bytes: int = 4 << 20,
) -> jax.Array:
    """relu(phi_o @ w_t).  phi_o: [B, phi_dim], w_t: [phi_dim, h_dim]."""
    B, K = phi_o.shape
    K2, N = w_t.shape
    assert K == K2, "phi_o feature dim must match weight in_features"
    out_dtype = phi_o.dtype

    if compute_dtype is not None:
        phi_o = phi_o.astype(compute_dtype)
        w_t = w_t.astype(compute_dtype)

    in_bytes = jnp.dtype(phi_o.dtype).itemsize
    working_set = (B * K + K * N) * in_bytes + B * N * jnp.dtype(out_dtype).itemsize

    # ---- Fast path: everything fits comfortably in VMEM -> single block. ----
    if working_set <= single_shot_limit_bytes:
        return pl.pallas_call(
            _single_block_kernel,
            out_shape=jax.ShapeDtypeStruct((B, N), out_dtype),
            in_specs=[
                pl.BlockSpec(memory_space=pltpu.MemorySpace.VMEM),
                pl.BlockSpec(memory_space=pltpu.MemorySpace.VMEM),
            ],
            out_specs=pl.BlockSpec(memory_space=pltpu.MemorySpace.VMEM),
        )(phi_o, w_t)

    # ---- Tiled fallback for large B / phi_dim. ------------------------------
    # Pad (instead of asserting divisibility); zero-padded K rows/cols do not
    # change the matmul result, padded batch rows are sliced off at the end.
    tm = min(tm, _round_up(B, 8))
    tk = min(tk, _round_up(K, 128))
    Bp = _round_up(B, tm)
    Kp = _round_up(K, tk)
    if (Bp, Kp) != (B, K):
        phi_o = jnp.pad(phi_o, ((0, Bp - B), (0, Kp - K)))
    if Kp != K:
        w_t = jnp.pad(w_t, ((0, Kp - K), (0, 0)))

    grid = (Bp // tm, Kp // tk)
    out = pl.pallas_call(
        _tiled_kernel,
        out_shape=jax.ShapeDtypeStruct((Bp, N), out_dtype),
        grid_spec=pltpu.PrefetchScalarGridSpec(
            num_scalar_prefetch=0,
            grid=grid,
            in_specs=[
                pl.BlockSpec((tm, tk), lambda i, k: (i, k)),
                pl.BlockSpec((tk, N), lambda i, k: (k, 0)),
            ],
            # Output block is resident across the K axis (accumulator pattern).
            out_specs=pl.BlockSpec((tm, N), lambda i, k: (i, 0)),
            scratch_shapes=[pltpu.VMEM((tm, N), jnp.float32)],
        ),
        compiler_params=pltpu.CompilerParams(
            # M is independent -> "parallel" (lets v7x's 2 TCs split the batch);
            # K is the reduction -> last axis, "arbitrary".
            dimension_semantics=("parallel", "arbitrary"),
        ),
    )(phi_o, w_t)
    return out[:B]


def reference(phi_o, w_t):
    return jnp.maximum(phi_o @ w_t, 0.0)


# --------------------------------------------------------------------------
# Demo / self-check
# --------------------------------------------------------------------------
if __name__ == "__main__":
    B = 8           # batch of boxes
    phi_dim = 1024  # module default phi_dim
    h_dim = 32      # hidden dim

    key = jax.random.PRNGKey(0)
    k_phi, k_w, k_c = jax.random.split(key, 3)

    phi_o = jax.random.normal(k_phi, (B, phi_dim), dtype=jnp.float32)
    # c_hat is unused by the forward pass (kept only for interface parity).
    c_hat = jax.random.normal(k_c, (B, 4), dtype=jnp.float32)

    # PyTorch Linear-style uniform(-1/sqrt(in), 1/sqrt(in)) init, bias=False.
    bound = 1.0 / jnp.sqrt(jnp.float32(phi_dim))
    w = jax.random.uniform(
        k_w, (h_dim, phi_dim), dtype=jnp.float32, minval=-bound, maxval=bound
    )
    w_t = w.T  # [phi_dim, h_dim]

    ref = reference(phi_o, w_t)

    # 1) Default single-shot f32 path (no grid, no accumulator).
    out = jax.block_until_ready(initializer_no_class(phi_o, w_t))
    assert out.shape == (B, h_dim)
    assert jnp.allclose(out, ref, atol=1e-4, rtol=1e-4), "f32 single-shot mismatch"

    # 2) bf16 MXU operands, f32 accumulate, f32 output.
    out_bf16 = jax.block_until_ready(
        initializer_no_class(phi_o, w_t, compute_dtype=jnp.bfloat16)
    )
    assert jnp.allclose(out_bf16, ref, atol=2e-2, rtol=2e-2), "bf16 mismatch"

    # 3) Exercise the tiled fallback (odd B / phi_dim, forced via size limit):
    #    checks the padded K-reduction + parallel M grid path compiles and is
    #    numerically identical.
    B2, K2 = 10, 1000
    phi2 = jax.random.normal(jax.random.PRNGKey(1), (B2, K2), dtype=jnp.float32)
    w2 = jax.random.uniform(
        jax.random.PRNGKey(2), (h_dim, K2), dtype=jnp.float32,
        minval=-bound, maxval=bound,
    )
    out2 = jax.block_until_ready(
        initializer_no_class(
            phi2, w2.T, tk=256, tm=256, single_shot_limit_bytes=0
        )
    )
    ref2 = reference(phi2, w2.T)
    assert out2.shape == (B2, h_dim)
    assert jnp.allclose(out2, ref2, atol=1e-4, rtol=1e-4), "tiled path mismatch"

    print("KERNEL_OK")
</pallas_src>

<mosaic_0001>
module attributes {stable_mosaic.version = 11 : i64} {
  func.func @_single_block_kernel(%arg0: memref<8x1024xf32, #tpu.memory_space<vmem>>, %arg1: memref<1024x32xf32, #tpu.memory_space<vmem>>, %arg2: memref<8x32xf32, #tpu.memory_space<vmem>>) attributes {dimension_semantics = [], scalar_prefetch = 0 : i64, scratch_operands = 0 : i64, tpu.core_type = #tpu.core_type<tc>} {
    %c0 = arith.constant 0 : index
    %c0_0 = arith.constant 0 : index
    %0 = vector.load %arg0[%c0, %c0_0] : memref<8x1024xf32, #tpu.memory_space<vmem>>, vector<8x1024xf32>
    %c0_1 = arith.constant 0 : index
    %c0_2 = arith.constant 0 : index
    %1 = vector.load %arg1[%c0_1, %c0_2] : memref<1024x32xf32, #tpu.memory_space<vmem>>, vector<1024x32xf32>
    %cst = arith.constant dense<0.000000e+00> : vector<8x32xf32>
    %2 = tpu.matmul %0, %1, %cst {dimension_numbers = #tpu.dot_dimension_numbers<[1], [0], [0], [1], [0, 0, 1, 1], [], []>} : vector<8x1024xf32>, vector<1024x32xf32>, vector<8x32xf32> -> vector<8x32xf32>
    %cst_3 = arith.constant 0.000000e+00 : f32
    %3 = vector.broadcast %cst_3 : f32 to vector<8x32xf32>
    %4 = arith.maximumf %2, %3 : vector<8x32xf32>
    %c0_4 = arith.constant 0 : index
    %c0_5 = arith.constant 0 : index
    %5 = vector.load %arg2[%c0_4, %c0_5] : memref<8x32xf32, #tpu.memory_space<vmem>>, vector<8x32xf32>
    tpu.vector_store %arg2[%c0_4, %c0_5], %4 {strides = array<i32>} : memref<8x32xf32, #tpu.memory_space<vmem>>, vector<8x32xf32>,
    return
  }
}

</mosaic_0001>

<llo_original>
// kernel: initializer_no_class.1
$region0: #{initializer_no_class.1}
  #allocation0 [shape = 'u32[]', space=smem, size = 0x4, offset = 0x4, fixed_abs, tag = 'smem constant byte address 0x4 - core index']
  #allocation1 [shape = 'u32[72,128]{1,0:T(1,128)}', space=vmem, size = 0x9000, scoped, tag = 'internal scratch']
  %s0 = inlined_call_operand.vmem [shape: f32[8,1024], index: 0, kind: input, shape index: {}]
  %s1 = inlined_call_operand.vmem [shape: f32[1024,32], index: 1, kind: input, shape index: {}]
  %s2 = inlined_call_operand.hbm [shape: f32[8,32], index: 2, kind: output, shape index: {}]
  %s3 = sld [smem:[#allocation0]]
  $region18: #{initializer_no_class.1} parent=0
    _
  %s5 = ssub.s32 1, %s3
  %s6 = scalar_select 0, %s5, %s3
  $region1: #{initializer_no_class.1} parent=0
    #allocation2 [shape = 'u8[4096]{0}', space=vmem, size = 0x1000, scoped, tag = 'output window, operand 0, single buffered']
    #allocation3 [shape = 's32[1]{0}', space=sflag, size = 0x4, scoped, tag = 'scoped memory for initializer_no_class.1']
    %7 = vsyncpa [#allocation3], 0
    // Predicated region
    $region2: #{initializer_no_class.1} parent=1 // pred_check
      _
    $region3: #{initializer_no_class.1} parent=1 // pred_check_branch
      %9 = sbr.rel (0) target = $region5
    $region4: #{initializer_no_class.1} parent=1 // pred_region
      _
    $region5: #{initializer_no_class.1} parent=1 // pred_fallthru
      _
    // Predicated region
    $region6: #{initializer_no_class.1} parent=1 // pred_check
      _
    $region7: #{initializer_no_class.1} parent=1 // pred_check_branch
      %11 = sbr.rel (0) target = $region9
    $region8: #{initializer_no_class.1} parent=1 // pred_region
      _
    $region9: #{initializer_no_class.1} parent=1 // pred_fallthru
      _
    %v12 = vld [vmem:[%s0] sm:$0xff]
    %v13 = vld [vmem:[%s0 + $0x8] sm:$0xff]
    %v14 = vld [vmem:[%s0 + $0x10] sm:$0xff]
    %v15 = vld [vmem:[%s0 + $0x18] sm:$0xff]
    %v16 = vld [vmem:[%s0 + $0x20] sm:$0xff]
    %v17 = vld [vmem:[%s0 + $0x28] sm:$0xff]
    %v18 = vld [vmem:[%s0 + $0x30] sm:$0xff]
    %v19 = vld [vmem:[%s0 + $0x38] sm:$0xff]
    %v20 = vld [vmem:[%s1] sm:$0xff]
    %v21 = vld [vmem:[%s1 + $0x8] sm:$0xff]
    %v22 = vld [vmem:[%s1 + $0x10] sm:$0xff]
    %v23 = vld [vmem:[%s1 + $0x18] sm:$0xff]
    %v24 = vld [vmem:[%s1 + $0x20] sm:$0xff]
    %v25 = vld [vmem:[%s1 + $0x28] sm:$0xff]
    %v26 = vld [vmem:[%s1 + $0x30] sm:$0xff]
    %v27 = vld [vmem:[%s1 + $0x38] sm:$0xff]
    %v28 = vld [vmem:[%s1 + $0x40] sm:$0xff]
    %v29 = vld [vmem:[%s1 + $0x48] sm:$0xff]
    %v30 = vld [vmem:[%s1 + $0x50] sm:$0xff]
    %v31 = vld [vmem:[%s1 + $0x58] sm:$0xff]
    %v32 = vld [vmem:[%s1 + $0x60] sm:$0xff]
    %v33 = vld [vmem:[%s1 + $0x68] sm:$0xff]
    %v34 = vld [vmem:[%s1 + $0x70] sm:$0xff]
    %v35 = vld [vmem:[%s1 + $0x78] sm:$0xff]
    %v36 = vld [vmem:[%s1 + $0x80] sm:$0xff]
    %v37 = vld [vmem:[%s1 + $0x88] sm:$0xff]
    %v38 = vld [vmem:[%s1 + $0x90] sm:$0xff]
    %v39 = vld [vmem:[%s1 + $0x98] sm:$0xff]
    %v40 = vld [vmem:[%s1 + $0xa0] sm:$0xff]
    %v41 = vld [vmem:[%s1 + $0xa8] sm:$0xff]
    %v42 = vld [vmem:[%s1 + $0xb0] sm:$0xff]
    %v43 = vld [vmem:[%s1 + $0xb8] sm:$0xff]
    %v44 = vld [vmem:[%s1 + $0xc0] sm:$0xff]
    %v45 = vld [vmem:[%s1 + $0xc8] sm:$0xff]
    %v46 = vld [vmem:[%s1 + $0xd0] sm:$0xff]
    %v47 = vld [vmem:[%s1 + $0xd8] sm:$0xff]
    %v48 = vld [vmem:[%s1 + $0xe0] sm:$0xff]
    %v49 = vld [vmem:[%s1 + $0xe8] sm:$0xff]
    %v50 = vld [vmem:[%s1 + $0xf0] sm:$0xff]
    %v51 = vld [vmem:[%s1 + $0xf8] sm:$0xff]
    %v52 = vld [vmem:[%s1 + $0x100] sm:$0xff]
    %v53 = vld [vmem:[%s1 + $0x108] sm:$0xff]
    %v54 = vld [vmem:[%s1 + $0x110] sm:$0xff]
    %v55 = vld [vmem:[%s1 + $0x118] sm:$0xff]
    %v56 = vld [vmem:[%s1 + $0x120] sm:$0xff]
    %v57 = vld [vmem:[%s1 + $0x128] sm:$0xff]
    %v58 = vld [vmem:[%s1 + $0x130] sm:$0xff]
    %v59 = vld [vmem:[%s1 + $0x138] sm:$0xff]
    %v60 = vld [vmem:[%s1 + $0x140] sm:$0xff]
    %v61 = vld [vmem:[%s1 + $0x148] sm:$0xff]
    %v62 = vld [vmem:[%s1 + $0x150] sm:$0xff]
    %v63 = vld [vmem:[%s1 + $0x158] sm:$0xff]
    %v64 = vld [vmem:[%s1 + $0x160] sm:$0xff]
    %v65 = vld [vmem:[%s1 + $0x168] sm:$0xff]
    %v66 = vld [vmem:[%s1 + $0x170] sm:$0xff]
    %v67 = vld [vmem:[%s1 + $0x178] sm:$0xff]
    %v68 = vld [vmem:[%s1 + $0x180] sm:$0xff]
    %v69 = vld [vmem:[%s1 + $0x188] sm:$0xff]
    %v70 = vld [vmem:[%s1 + $0x190] sm:$0xff]
    %v71 = vld [vmem:[%s1 + $0x198] sm:$0xff]
    %v72 = vld [vmem:[%s1 + $0x1a0] sm:$0xff]
    %v73 = vld [vmem:[%s1 + $0x1a8] sm:$0xff]
    %v74 = vld [vmem:[%s1 + $0x1b0] sm:$0xff]
    %v75 = vld [vmem:[%s1 + $0x1b8] sm:$0xff]
    %v76 = vld [vmem:[%s1 + $0x1c0] sm:$0xff]
    %v77 = vld [vmem:[%s1 + $0x1c8] sm:$0xff]
    %v78 = vld [vmem:[%s1 + $0x1d0] sm:$0xff]
    %v79 = vld [vmem:[%s1 + $0x1d8] sm:$0xff]
    %v80 = vld [vmem:[%s1 + $0x1e0] sm:$0xff]
    %v81 = vld [vmem:[%s1 + $0x1e8] sm:$0xff]
    %v82 = vld [vmem:[%s1 + $0x1f0] sm:$0xff]
    %v83 = vld [vmem:[%s1 + $0x1f8] sm:$0xff]
    %v84 = vld [vmem:[%s1 + $0x200] sm:$0xff]
    %v85 = vld [vmem:[%s1 + $0x208] sm:$0xff]
    %v86 = vld [vmem:[%s1 + $0x210] sm:$0xff]
    %v87 = vld [vmem:[%s1 + $0x218] sm:$0xff]
    %v88 = vld [vmem:[%s1 + $0x220] sm:$0xff]
    %v89 = vld [vmem:[%s1 + $0x228] sm:$0xff]
    %v90 = vld [vmem:[%s1 + $0x230] sm:$0xff]
    %v91 = vld [vmem:[%s1 + $0x238] sm:$0xff]
    %v92 = vld [vmem:[%s1 + $0x240] sm:$0xff]
    %v93 = vld [vmem:[%s1 + $0x248] sm:$0xff]
    %v94 = vld [vmem:[%s1 + $0x250] sm:$0xff]
    %v95 = vld [vmem:[%s1 + $0x258] sm:$0xff]
    %v96 = vld [vmem:[%s1 + $0x260] sm:$0xff]
    %v97 = vld [vmem:[%s1 + $0x268] sm:$0xff]
    %v98 = vld [vmem:[%s1 + $0x270] sm:$0xff]
    %v99 = vld [vmem:[%s1 + $0x278] sm:$0xff]
    %v100 = vld [vmem:[%s1 + $0x280] sm:$0xff]
    %v101 = vld [vmem:[%s1 + $0x288] sm:$0xff]
    %v102 = vld [vmem:[%s1 + $0x290] sm:$0xff]
    %v103 = vld [vmem:[%s1 + $0x298] sm:$0xff]
    %v104 = vld [vmem:[%s1 + $0x2a0] sm:$0xff]
    %v105 = vld [vmem:[%s1 + $0x2a8] sm:$0xff]
    %v106 = vld [vmem:[%s1 + $0x2b0] sm:$0xff]
    %v107 = vld [vmem:[%s1 + $0x2b8] sm:$0xff]
    %v108 = vld [vmem:[%s1 + $0x2c0] sm:$0xff]
    %v109 = vld [vmem:[%s1 + $0x2c8] sm:$0xff]
    %v110 = vld [vmem:[%s1 + $0x2d0] sm:$0xff]
    %v111 = vld [vmem:[%s1 + $0x2d8] sm:$0xff]
    %v112 = vld [vmem:[%s1 + $0x2e0] sm:$0xff]
    %v113 = vld [vmem:[%s1 + $0x2e8] sm:$0xff]
    %v114 = vld [vmem:[%s1 + $0x2f0] sm:$0xff]
    %v115 = vld [vmem:[%s1 + $0x2f8] sm:$0xff]
    %v116 = vld [vmem:[%s1 + $0x300] sm:$0xff]
    %v117 = vld [vmem:[%s1 + $0x308] sm:$0xff]
    %v118 = vld [vmem:[%s1 + $0x310] sm:$0xff]
    %v119 = vld [vmem:[%s1 + $0x318] sm:$0xff]
    %v120 = vld [vmem:[%s1 + $0x320] sm:$0xff]
    %v121 = vld [vmem:[%s1 + $0x328] sm:$0xff]
    %v122 = vld [vmem:[%s1 + $0x330] sm:$0xff]
    %v123 = vld [vmem:[%s1 + $0x338] sm:$0xff]
    %v124 = vld [vmem:[%s1 + $0x340] sm:$0xff]
    %v125 = vld [vmem:[%s1 + $0x348] sm:$0xff]
    %v126 = vld [vmem:[%s1 + $0x350] sm:$0xff]
    %v127 = vld [vmem:[%s1 + $0x358] sm:$0xff]
    %v128 = vld [vmem:[%s1 + $0x360] sm:$0xff]
    %v129 = vld [vmem:[%s1 + $0x368] sm:$0xff]
    %v130 = vld [vmem:[%s1 + $0x370] sm:$0xff]
    %v131 = vld [vmem:[%s1 + $0x378] sm:$0xff]
    %v132 = vld [vmem:[%s1 + $0x380] sm:$0xff]
    %v133 = vld [vmem:[%s1 + $0x388] sm:$0xff]
    %v134 = vld [vmem:[%s1 + $0x390] sm:$0xff]
    %v135 = vld [vmem:[%s1 + $0x398] sm:$0xff]
    %v136 = vld [vmem:[%s1 + $0x3a0] sm:$0xff]
    %v137 = vld [vmem:[%s1 + $0x3a8] sm:$0xff]
    %v138 = vld [vmem:[%s1 + $0x3b0] sm:$0xff]
    %v139 = vld [vmem:[%s1 + $0x3b8] sm:$0xff]
    %v140 = vld [vmem:[%s1 + $0x3c0] sm:$0xff]
    %v141 = vld [vmem:[%s1 + $0x3c8] sm:$0xff]
    %v142 = vld [vmem:[%s1 + $0x3d0] sm:$0xff]
    %v143 = vld [vmem:[%s1 + $0x3d8] sm:$0xff]
    %v144 = vld [vmem:[%s1 + $0x3e0] sm:$0xff]
    %v145 = vld [vmem:[%s1 + $0x3e8] sm:$0xff]
    %v146 = vld [vmem:[%s1 + $0x3f0] sm:$0xff]
    %v147 = vld [vmem:[%s1 + $0x3f8] sm:$0xff]
    %148 = vmatpush.msra.mxu0 %v35
    %149 = vmatpush.msra.mxu0 %v34
    %150 = vmatpush.msra.mxu0 %v33
    %151 = vmatpush.msra.mxu0 %v32
    %152 = vmatpush.msra.mxu0 %v31
    %153 = vmatpush.msra.mxu0 %v30
    %154 = vmatpush.msra.mxu0 %v29
    %155 = vmatpush.msra.mxu0 %v28
    %156 = vmatpush.msra.mxu0 %v27
    %157 = vmatpush.msra.mxu0 %v26
    %158 = vmatpush.msra.mxu0 %v25
    %159 = vmatpush.msra.mxu0 %v24
    %160 = vmatpush.msra.mxu0 %v23
    %161 = vmatpush.msra.mxu0 %v22
    %162 = vmatpush.msra.mxu0 %v21
    %163 = vmatpush.msra.mxu0 %v20
    %164 = vmatmul.f32.gmra.mxu0 %v12
    %v165 = vpop.f32.mrf.mxu0
    %v166 = vadd.f32 0.0, %v165
    %167 = vdwg.mxu0
    %168 = vmatpush.msra.mxu0 %v51
    %169 = vmatpush.msra.mxu0 %v50
    %170 = vmatpush.msra.mxu0 %v49
    %171 = vmatpush.msra.mxu0 %v48
    %172 = vmatpush.msra.mxu0 %v47
    %173 = vmatpush.msra.mxu0 %v46
    %174 = vmatpush.msra.mxu0 %v45
    %175 = vmatpush.msra.mxu0 %v44
    %176 = vmatpush.msra.mxu0 %v43
    %177 = vmatpush.msra.mxu0 %v42
    %178 = vmatpush.msra.mxu0 %v41
    %179 = vmatpush.msra.mxu0 %v40
    %180 = vmatpush.msra.mxu0 %v39
    %181 = vmatpush.msra.mxu0 %v38
    %182 = vmatpush.msra.mxu0 %v37
    %183 = vmatpush.msra.mxu0 %v36
    %184 = vmatmul.f32.gmra.mxu0 %v13
    %v185 = vpop.f32.mrf.mxu0
    %v186 = vadd.f32 %v166, %v185
    %187 = vdwg.mxu0
    %188 = vmatpush.msra.mxu0 %v67
    %189 = vmatpush.msra.mxu0 %v66
    %190 = vmatpush.msra.mxu0 %v65
    %191 = vmatpush.msra.mxu0 %v64
    %192 = vmatpush.msra.mxu0 %v63
    %193 = vmatpush.msra.mxu0 %v62
    %194 = vmatpush.msra.mxu0 %v61
    %195 = vmatpush.msra.mxu0 %v60
    %196 = vmatpush.msra.mxu0 %v59
    %197 = vmatpush.msra.mxu0 %v58
    %198 = vmatpush.msra.mxu0 %v57
    %199 = vmatpush.msra.mxu0 %v56
    %200 = vmatpush.msra.mxu0 %v55
    %201 = vmatpush.msra.mxu0 %v54
    %202 = vmatpush.msra.mxu0 %v53
    %203 = vmatpush.msra.mxu0 %v52
    %204 = vmatmul.f32.gmra.mxu0 %v14
    %v205 = vpop.f32.mrf.mxu0
    %v206 = vadd.f32 %v186, %v205
    %207 = vdwg.mxu0
    %208 = vmatpush.msra.mxu0 %v83
    %209 = vmatpush.msra.mxu0 %v82
    %210 = vmatpush.msra.mxu0 %v81
    %211 = vmatpush.msra.mxu0 %v80
    %212 = vmatpush.msra.mxu0 %v79
    %213 = vmatpush.msra.mxu0 %v78
    %214 = vmatpush.msra.mxu0 %v77
    %215 = vmatpush.msra.mxu0 %v76
    %216 = vmatpush.msra.mxu0 %v75
    %217 = vmatpush.msra.mxu0 %v74
    %218 = vmatpush.msra.mxu0 %v73
    %219 = vmatpush.msra.mxu0 %v72
    %220 = vmatpush.msra.mxu0 %v71
    %221 = vmatpush.msra.mxu0 %v70
    %222 = vmatpush.msra.mxu0 %v69
    %223 = vmatpush.msra.mxu0 %v68
    %224 = vmatmul.f32.gmra.mxu0 %v15
    %v225 = vpop.f32.mrf.mxu0
    %v226 = vadd.f32 %v206, %v225
    %227 = vdwg.mxu0
    %228 = vmatpush.msra.mxu0 %v99
    %229 = vmatpush.msra.mxu0 %v98
    %230 = vmatpush.msra.mxu0 %v97
    %231 = vmatpush.msra.mxu0 %v96
    %232 = vmatpush.msra.mxu0 %v95
    %233 = vmatpush.msra.mxu0 %v94
    %234 = vmatpush.msra.mxu0 %v93
    %235 = vmatpush.msra.mxu0 %v92
    %236 = vmatpush.msra.mxu0 %v91
    %237 = vmatpush.msra.mxu0 %v90
    %238 = vmatpush.msra.mxu0 %v89
    %239 = vmatpush.msra.mxu0 %v88
    %240 = vmatpush.msra.mxu0 %v87
    %241 = vmatpush.msra.mxu0 %v86
    %242 = vmatpush.msra.mxu0 %v85
    %243 = vmatpush.msra.mxu0 %v84
    %244 = vmatmul.f32.gmra.mxu0 %v16
    %v245 = vpop.f32.mrf.mxu0
    %v246 = vadd.f32 %v226, %v245
    %247 = vdwg.mxu0
    %248 = vmatpush.msra.mxu0 %v115
    %249 = vmatpush.msra.mxu0 %v114
    %250 = vmatpush.msra.mxu0 %v113
    %251 = vmatpush.msra.mxu0 %v112
    %252 = vmatpush.msra.mxu0 %v111
    %253 = vmatpush.msra.mxu0 %v110
    %254 = vmatpush.msra.mxu0 %v109
    %255 = vmatpush.msra.mxu0 %v108
    %256 = vmatpush.msra.mxu0 %v107
    %257 = vmatpush.msra.mxu0 %v106
    %258 = vmatpush.msra.mxu0 %v105
    %259 = vmatpush.msra.mxu0 %v104
    %260 = vmatpush.msra.mxu0 %v103
    %261 = vmatpush.msra.mxu0 %v102
    %262 = vmatpush.msra.mxu0 %v101
    %263 = vmatpush.msra.mxu0 %v100
    %264 = vmatmul.f32.gmra.mxu0 %v17
    %v265 = vpop.f32.mrf.mxu0
    %v266 = vadd.f32 %v246, %v265
    %267 = vdwg.mxu0
    %268 = vmatpush.msra.mxu0 %v131
    %269 = vmatpush.msra.mxu0 %v130
    %270 = vmatpush.msra.mxu0 %v129
    %271 = vmatpush.msra.mxu0 %v128
    %272 = vmatpush.msra.mxu0 %v127
    %273 = vmatpush.msra.mxu0 %v126
    %274 = vmatpush.msra.mxu0 %v125
    %275 = vmatpush.msra.mxu0 %v124
    %276 = vmatpush.msra.mxu0 %v123
    %277 = vmatpush.msra.mxu0 %v122
    %278 = vmatpush.msra.mxu0 %v121
    %279 = vmatpush.msra.mxu0 %v120
    %280 = vmatpush.msra.mxu0 %v119
    %281 = vmatpush.msra.mxu0 %v118
    %282 = vmatpush.msra.mxu0 %v117
    %283 = vmatpush.msra.mxu0 %v116
    %284 = vmatmul.f32.gmra.mxu0 %v18
    %v285 = vpop.f32.mrf.mxu0
    %v286 = vadd.f32 %v266, %v285
    %287 = vdwg.mxu0
    %288 = vmatpush.msra.mxu0 %v147
    %289 = vmatpush.msra.mxu0 %v146
    %290 = vmatpush.msra.mxu0 %v145
    %291 = vmatpush.msra.mxu0 %v144
    %292 = vmatpush.msra.mxu0 %v143
    %293 = vmatpush.msra.mxu0 %v142
    %294 = vmatpush.msra.mxu0 %v141
    %295 = vmatpush.msra.mxu0 %v140
    %296 = vmatpush.msra.mxu0 %v139
    %297 = vmatpush.msra.mxu0 %v138
    %298 = vmatpush.msra.mxu0 %v137
    %299 = vmatpush.msra.mxu0 %v136
    %300 = vmatpush.msra.mxu0 %v135
    %301 = vmatpush.msra.mxu0 %v134
    %302 = vmatpush.msra.mxu0 %v133
    %303 = vmatpush.msra.mxu0 %v132
    %304 = vmatmul.f32.gmra.mxu0 %v19
    %v305 = vpop.f32.mrf.mxu0
    %v306 = vadd.f32 %v286, %v305
    %307 = vdwg.mxu0
    %v308 = vmax.f32 %v306, 0.0
    %vm309 = vcmask 261120
    %310 = vst.msk [vmem:[#allocation2] sm:$0xff] %vm309, %v308
    // Predicated region
    $region10: #{initializer_no_class.1} parent=1 // pred_check
      _
    $region11: #{initializer_no_class.1} parent=1 // pred_check_branch
      %312 = sbr.rel (0) target = $region13
    $region12: #{initializer_no_class.1} parent=1 // pred_region
      %314 = vsyncadd [#allocation3], 0
      %s316 = sshll.u32 [#allocation2], 4
      %s317 = int_to_ptr.vmem [resolvable:$true] %s316
      %s318 = sshll.u32 %s2, 4
      %s319 = int_to_ptr.hbm [resolvable:$true] %s318
      %321 = dma.vmem_to_hbm [thread:$0]  %s317, 128, %s319, [#allocation3]
    $region13: #{initializer_no_class.1} parent=1 // pred_fallthru
      _
    // Predicated region
    $region14: #{initializer_no_class.1} parent=1 // pred_check
      _
    $region15: #{initializer_no_class.1} parent=1 // pred_check_branch
      %323 = sbr.rel (0) target = $region17
    $region16: #{initializer_no_class.1} parent=1 // pred_region
      %325 = dma.done [#allocation3], 128
    $region17: #{initializer_no_class.1} parent=1 // pred_fallthru
      _
    %326 = vsyncpa [#allocation3], 1

</llo_original>
